<compile_context>
chip_gen: v6e
topology: v6e:2x2x1
jax: 0.10.0
libtpu: 0.0.40
codegen_flags: <defaults>
</compile_context>

<pallas_src>
import functools
import math

import jax
import jax.numpy as jnp
from jax import lax
from jax.experimental import pallas as pl
from jax.experimental.pallas import tpu as pltpu


def _round_up(x, m):
    return ((x + m - 1) // m) * m


def _vmem_budget_bytes():
    """Safe scoped-VMEM budget for the current generation (with headroom)."""
    try:
        cap = pltpu.get_tpu_info().vmem_capacity_bytes
    except Exception:
        cap = 64 << 20  # conservative (v7x per-TC) fallback
    # 75% of physical, capped at 96 MiB (v5e/v6e), -> 48 MiB on v7x.
    return min(int(cap * 3 // 4), 96 << 20)


def _make_linconstr_kernel(operand_dtype):
    def kernel(x_ref, w_ref, b_ref, o_ref, acc_ref):
        k = pl.program_id(2)

        @pl.when(k == 0)
        def _():
            acc_ref[...] = jnp.zeros_like(acc_ref)

        # Cast-then-clip: +-1 is exact in bf16, result identical to clip-then-cast,
        # and the clamped-W temporary / VPU op count are halved in bf16.
        w = w_ref[...]
        x = x_ref[...]
        if operand_dtype is not None and w.dtype != operand_dtype:
            w = w.astype(operand_dtype)
        if operand_dtype is not None and x.dtype != operand_dtype:
            x = x.astype(operand_dtype)
        w = jnp.clip(w, -1.0, 1.0)

        # Contract x's last dim with W's last dim (W stays in native (N, K) layout).
        acc_ref[...] += lax.dot_general(
            x, w,
            dimension_numbers=(((1,), (1,)), ((), ())),
            preferred_element_type=jnp.float32,
        )

        @pl.when(k == pl.num_programs(2) - 1)
        def _():
            o_ref[...] = (acc_ref[...] + b_ref[...]).astype(o_ref.dtype)

    return kernel


def linconstr_forward(x, weight, bias, *, tile_m=None, tile_n=None, tile_k=None,
                      operand_dtype=jnp.bfloat16):
    """y = x @ clamp(weight, -1, 1).T + bias  via a tiled Pallas TPU kernel.

    operand_dtype=jnp.bfloat16 (default): native-MXU bf16 operands with f32
    accumulation (looser numerics vs the f32 PyTorch reference).
    operand_dtype=None: exact f32 path.
    """
    batch, in_features = x.shape
    out_features, in_features_w = weight.shape
    assert in_features == in_features_w
    assert bias.shape == (out_features,)
    out_dtype = x.dtype

    op_dtype = jnp.dtype(operand_dtype) if operand_dtype is not None else jnp.dtype(x.dtype)
    op_bytes = op_dtype.itemsize
    out_bytes = jnp.dtype(out_dtype).itemsize
    sublane = 16 if op_bytes == 2 else 8  # bf16 packs 2 rows per sublane

    budget = _vmem_budget_bytes()

    m_full = _round_up(batch, sublane)
    n_full = _round_up(out_features, 128)
    k_full = _round_up(in_features, 128)

    # --- tile selection ------------------------------------------------------
    if tile_m is None:
        # Small-batch fast path: one M block => W streams from HBM exactly once.
        tm = m_full if m_full <= 2048 else 512
    else:
        tm = _round_up(min(tile_m, m_full), sublane)
    tm = min(tm, m_full)

    tn = min(_round_up(tile_n, 128) if tile_n is not None else 2048, n_full)
    tk = min(_round_up(tile_k, 128) if tile_k is not None else 512, k_full)

    # Shrink (largest reuse dims first) until the double-buffered working set
    # -- including the clamp(+cast) W temporary -- fits the VMEM budget.
    def vmem_bytes(tm_, tn_, tk_):
        return (tm_ * tn_ * 4                 # f32 accumulator scratch
                + 2 * tm_ * tn_ * out_bytes   # double-buffered output tile
                + 2 * tm_ * tk_ * op_bytes    # double-buffered x tile
                + 2 * tn_ * tk_ * op_bytes    # double-buffered W tile
                + tn_ * tk_ * op_bytes        # clamped-W temporary
                + 2 * tn_ * 4)                # bias tile

    while vmem_bytes(tm, tn, tk) > budget:
        if tn >= 256 and tn >= tm:
            tn = _round_up(tn // 2, 128)
        elif tm >= 2 * sublane:
            tm = _round_up(tm // 2, sublane)
        elif tk >= 256:
            tk = _round_up(tk // 2, 128)
        else:
            break

    # Megacore (v7x has 2 TCs sharded over parallel axes): keep >= 2 parallel
    # grid points when the problem allows it.  Costs ~nothing on 1-TC chips.
    if tile_m is None and tile_n is None:
        gm0 = _round_up(batch, tm) // tm
        gn0 = _round_up(out_features, tn) // tn
        if gm0 * gn0 == 1:
            if tn % 256 == 0:
                tn //= 2
            elif tm % (2 * sublane) == 0:
                tm //= 2

    m_pad = _round_up(batch, tm)
    n_pad = _round_up(out_features, tn)
    k_pad = _round_up(in_features, tk)

    # Cast in the wrapper (fuses with the pad): HBM->VMEM DMA moves op_bytes/elem.
    # Zero-padding is semantically safe: clamp(0) == 0 and zero rows/cols add nothing.
    x_src = x if x.dtype == op_dtype else x.astype(op_dtype)
    w_src = weight if weight.dtype == op_dtype else weight.astype(op_dtype)
    x_p = jnp.pad(x_src, ((0, m_pad - batch), (0, k_pad - in_features)))
    w_p = jnp.pad(w_src, ((0, n_pad - out_features), (0, k_pad - in_features)))
    b_p = jnp.pad(bias.astype(jnp.float32), (0, n_pad - out_features)).reshape(1, n_pad)

    gm, gn, gk = m_pad // tm, n_pad // tn, k_pad // tk
    grid = (gm, gn, gk)

    flops = 2 * batch * in_features * out_features
    # Actual streamed traffic: x re-read once per N block, W once per M block,
    # bias once per M block, output written once.
    bytes_accessed = int(
        m_pad * k_pad * op_bytes * gn
        + n_pad * k_pad * op_bytes * gm
        + n_pad * 4 * gm
        + m_pad * n_pad * out_bytes
    )

    kernel = _make_linconstr_kernel(None if operand_dtype is None else op_dtype)

    out_p = pl.pallas_call(
        kernel,
        out_shape=jax.ShapeDtypeStruct((m_pad, n_pad), out_dtype),
        grid_spec=pltpu.PrefetchScalarGridSpec(
            num_scalar_prefetch=0,
            grid=grid,
            in_specs=[
                # x tile: (tm, tk), indexed by (batch block, K block)
                pl.BlockSpec((tm, tk), lambda i, j, k: (i, k)),
                # W tile in native (N, K) layout, indexed by (N block, K block)
                pl.BlockSpec((tn, tk), lambda i, j, k: (j, k)),
                # bias row tile, indexed by N block
                pl.BlockSpec((1, tn), lambda i, j, k: (0, j)),
            ],
            out_specs=pl.BlockSpec((tm, tn), lambda i, j, k: (i, j)),
            scratch_shapes=[pltpu.VMEM((tm, tn), jnp.float32)],
        ),
        compiler_params=pltpu.CompilerParams(
            dimension_semantics=("parallel", "parallel", "arbitrary"),
            vmem_limit_bytes=int(budget),
        ),
        cost_estimate=pl.CostEstimate(
            flops=flops, transcendentals=0, bytes_accessed=bytes_accessed
        ),
    )(x_p, w_p, b_p)

    return out_p[:batch, :out_features]


def linconstr_reference(x, weight, bias, operand_dtype=jnp.bfloat16):
    """Pure-JAX reference matching the kernel's operand precision."""
    if operand_dtype is not None:
        xo = x.astype(operand_dtype)
        wo = jnp.clip(weight.astype(operand_dtype), -1.0, 1.0)
    else:
        xo = x
        wo = jnp.clip(weight, -1.0, 1.0)
    y = jnp.dot(xo, wo.T, preferred_element_type=jnp.float32) + bias.astype(jnp.float32)
    return y.astype(x.dtype)


def init_linconstr_params(key, in_features, out_features, dtype=jnp.float32):
    """Deterministic init mirroring the PyTorch module's __init__:
    kaiming_uniform_(a=sqrt(5)) on weight, uniform(-1/sqrt(fan_in), 1/sqrt(fan_in)) on bias.
    """
    kw, kb = jax.random.split(key)
    fan_in = in_features
    gain = math.sqrt(2.0 / (1.0 + 5.0))  # kaiming_uniform with a=sqrt(5)
    w_bound = gain * math.sqrt(3.0 / fan_in)
    weight = jax.random.uniform(
        kw, (out_features, in_features), dtype=dtype, minval=-w_bound, maxval=w_bound
    )
    b_bound = 1.0 / math.sqrt(fan_in) if fan_in > 0 else 0.0
    bias = jax.random.uniform(
        kb, (out_features,), dtype=dtype, minval=-b_bound, maxval=b_bound
    )
    return weight, bias


if __name__ == "__main__":
    key = jax.random.PRNGKey(0)
    k_x, k_p, k_x2, k_p2, k_x3, k_p3 = jax.random.split(key, 6)

    # 1) Small case, default bf16-operand path.
    batch, in_features, out_features = 8, 32, 32
    x = jax.random.normal(k_x, (batch, in_features), dtype=jnp.float32)
    weight, bias = init_linconstr_params(k_p, in_features, out_features)
    y = jax.block_until_ready(linconstr_forward(x, weight, bias))
    assert y.shape == (batch, out_features)
    assert jnp.allclose(y, linconstr_reference(x, weight, bias), atol=1e-3, rtol=1e-3)
    y_f32_ref = x @ jnp.clip(weight, -1.0, 1.0).T + bias
    assert jnp.allclose(y, y_f32_ref, atol=3e-2, rtol=3e-2)  # bf16-operand numerics

    # 2) Ragged (non-128-aligned) shapes to exercise the padding path.
    b2, i2, o2 = 8, 48, 40
    x2 = jax.random.normal(k_x2, (b2, i2), dtype=jnp.float32)
    w2, bi2 = init_linconstr_params(k_p2, i2, o2)
    y2 = jax.block_until_ready(linconstr_forward(x2, w2, bi2))
    assert y2.shape == (b2, o2)
    assert jnp.allclose(y2, linconstr_reference(x2, w2, bi2), atol=1e-3, rtol=1e-3)

    # 3) Small tiles forced to exercise the multi-block (i, j, k) grid +
    #    K-axis accumulator init/finalize path.
    b3, i3, o3 = 16, 256, 192
    x3 = jax.random.normal(k_x3, (b3, i3), dtype=jnp.float32)
    w3, bi3 = init_linconstr_params(k_p3, i3, o3)
    y3 = jax.block_until_ready(
        linconstr_forward(x3, w3, bi3, tile_m=16, tile_n=128, tile_k=128)
    )
    assert y3.shape == (b3, o3)
    assert jnp.allclose(y3, linconstr_reference(x3, w3, bi3), atol=2e-3, rtol=2e-3)
    y3_f32_ref = x3 @ jnp.clip(w3, -1.0, 1.0).T + bi3
    assert jnp.allclose(y3, y3_f32_ref, atol=5e-2, rtol=5e-2)

    # 4) Exact f32-operand path still matches the PyTorch reference tightly.
    y4 = jax.block_until_ready(linconstr_forward(x, weight, bias, operand_dtype=None))
    assert jnp.allclose(y4, y_f32_ref, atol=1e-5, rtol=1e-5)

    print("KERNEL_OK")
</pallas_src>

<mosaic_0001>
module attributes {stable_mosaic.version = 11 : i64} {
  func.func @kernel(%arg0: i32, %arg1: i32, %arg2: i32, %arg3: memref<16x128xbf16, #tpu.memory_space<vmem>>, %arg4: memref<128x128xbf16, #tpu.memory_space<vmem>>, %arg5: memref<1x128xf32, #tpu.memory_space<vmem>>, %arg6: memref<16x128xf32, #tpu.memory_space<vmem>>, %arg7: memref<16x128xf32, #tpu.memory_space<vmem>>) attributes {dimension_semantics = [#tpu.dimension_semantics<parallel>, #tpu.dimension_semantics<parallel>, #tpu.dimension_semantics<arbitrary>], iteration_bounds = array<i64: 1, 1, 1>, scalar_prefetch = 0 : i64, scratch_operands = 1 : i64, tpu.core_type = #tpu.core_type<tc>, window_params = [{transform_indices = @transform_0, window_bounds = array<i64: 16, 128>}, {transform_indices = @transform_1, window_bounds = array<i64: 128, 128>}, {transform_indices = @transform_2, window_bounds = array<i64: 1, 128>}, {transform_indices = @transform_3, window_bounds = array<i64: 16, 128>}]} {
    %c0_i32 = arith.constant 0 : i32
    %0 = arith.cmpi eq, %arg2, %c0_i32 : i32
    %1 = arith.extui %0 : i1 to i32
    %c0_i32_0 = arith.constant 0 : i32
    %2 = arith.cmpi ne, %1, %c0_i32_0 : i32
    scf.if %2 {
      %cst_12 = arith.constant 0.000000e+00 : f32
      %18 = vector.broadcast %cst_12 : f32 to vector<16x128xf32>
      %c0_13 = arith.constant 0 : index
      %c0_14 = arith.constant 0 : index
      %19 = vector.load %arg7[%c0_13, %c0_14] : memref<16x128xf32, #tpu.memory_space<vmem>>, vector<16x128xf32>
      tpu.vector_store %arg7[%c0_13, %c0_14], %18 {strides = array<i32>} : memref<16x128xf32, #tpu.memory_space<vmem>>, vector<16x128xf32>,
    } else {
    }
    %c0 = arith.constant 0 : index
    %c0_1 = arith.constant 0 : index
    %3 = vector.load %arg4[%c0, %c0_1] : memref<128x128xbf16, #tpu.memory_space<vmem>>, vector<128x128xbf16>
    %c0_2 = arith.constant 0 : index
    %c0_3 = arith.constant 0 : index
    %4 = vector.load %arg3[%c0_2, %c0_3] : memref<16x128xbf16, #tpu.memory_space<vmem>>, vector<16x128xbf16>
    %cst = arith.constant -1.000000e+00 : f32
    %cst_4 = arith.constant 1.000000e+00 : f32
    %5 = arith.truncf %cst : f32 to bf16
    %6 = vector.broadcast %5 : bf16 to vector<128x128xbf16>
    %7 = arith.maximumf %6, %3 : vector<128x128xbf16>
    %8 = arith.truncf %cst_4 : f32 to bf16
    %9 = vector.broadcast %8 : bf16 to vector<128x128xbf16>
    %10 = arith.minimumf %9, %7 : vector<128x128xbf16>
    %c0_5 = arith.constant 0 : index
    %c0_6 = arith.constant 0 : index
    %11 = vector.load %arg7[%c0_5, %c0_6] : memref<16x128xf32, #tpu.memory_space<vmem>>, vector<16x128xf32>
    %cst_7 = arith.constant dense<0.000000e+00> : vector<16x128xf32>
    %12 = tpu.matmul %4, %10, %cst_7 {dimension_numbers = #tpu.dot_dimension_numbers<[1], [1], [0], [0], [0, 0, 1, 0], [], []>} : vector<16x128xbf16>, vector<128x128xbf16>, vector<16x128xf32> -> vector<16x128xf32>
    %13 = arith.addf %11, %12 : vector<16x128xf32>
    %c0_8 = arith.constant 0 : index
    %c0_9 = arith.constant 0 : index
    %14 = vector.load %arg7[%c0_8, %c0_9] : memref<16x128xf32, #tpu.memory_space<vmem>>, vector<16x128xf32>
    tpu.vector_store %arg7[%c0_8, %c0_9], %13 {strides = array<i32>} : memref<16x128xf32, #tpu.memory_space<vmem>>, vector<16x128xf32>,
    %c0_i32_10 = arith.constant 0 : i32
    %15 = arith.cmpi eq, %arg2, %c0_i32_10 : i32
    %16 = arith.extui %15 : i1 to i32
    %c0_i32_11 = arith.constant 0 : i32
    %17 = arith.cmpi ne, %16, %c0_i32_11 : i32
    scf.if %17 {
      %c0_12 = arith.constant 0 : index
      %c0_13 = arith.constant 0 : index
      %18 = vector.load %arg7[%c0_12, %c0_13] : memref<16x128xf32, #tpu.memory_space<vmem>>, vector<16x128xf32>
      %c0_14 = arith.constant 0 : index
      %c0_15 = arith.constant 0 : index
      %19 = vector.load %arg5[%c0_14, %c0_15] : memref<1x128xf32, #tpu.memory_space<vmem>>, vector<1x128xf32>
      %20 = vector.broadcast %19 : vector<1x128xf32> to vector<16x128xf32>
      %21 = arith.addf %18, %20 : vector<16x128xf32>
      %c0_16 = arith.constant 0 : index
      %c0_17 = arith.constant 0 : index
      %22 = vector.load %arg6[%c0_16, %c0_17] : memref<16x128xf32, #tpu.memory_space<vmem>>, vector<16x128xf32>
      tpu.vector_store %arg6[%c0_16, %c0_17], %21 {strides = array<i32>} : memref<16x128xf32, #tpu.memory_space<vmem>>, vector<16x128xf32>,
    } else {
    }
    return
  }
  func.func @transform_0(%arg0: i32, %arg1: i32, %arg2: i32) -> (i32, i32) {
    %c0_i32 = arith.constant 0 : i32
    return %arg0, %arg2 : i32, i32
  }
  func.func @transform_1(%arg0: i32, %arg1: i32, %arg2: i32) -> (i32, i32) {
    %c0_i32 = arith.constant 0 : i32
    return %arg1, %arg2 : i32, i32
  }
  func.func @transform_2(%arg0: i32, %arg1: i32, %arg2: i32) -> (i32, i32) {
    %c0_i32 = arith.constant 0 : i32
    %c0_i32_0 = arith.constant 0 : i32
    return %c0_i32, %arg1 : i32, i32
  }
  func.func @transform_3(%arg0: i32, %arg1: i32, %arg2: i32) -> (i32, i32) {
    %c0_i32 = arith.constant 0 : i32
    return %arg0, %arg1 : i32, i32
  }
}

</mosaic_0001>

<llo_original>
// kernel: tpu_custom_call.1
$region0: #{tpu_custom_call.1}
  #allocation0 [shape = 'u32[]', space=smem, size = 0x4, offset = 0x4, fixed_abs, tag = 'smem constant byte address 0x4 - core index']
  #allocation1 [shape = 'u32[144,128]{1,0:T(1,128)}', space=vmem, size = 0x12000, scoped, tag = 'internal scratch']
  #allocation2 [shape = 'f32[16,128]{1,0:T(8,128)}', space=vmem, size = 0x2000, scoped, tag = 'scratch operand']
  %s0 = inlined_call_operand.hbm [shape: bf16[16,128], index: 0, kind: input, shape index: {}]
  %s1 = inlined_call_operand.hbm [shape: bf16[128,128], index: 1, kind: input, shape index: {}]
  %s2 = inlined_call_operand.vmem [shape: f32[1,128], index: 2, kind: input, shape index: {}]
  %s3 = inlined_call_operand.hbm [shape: f32[16,128], index: 3, kind: output, shape index: {}]
  %s4 = sld [smem:[#allocation0]]
  $region38: #{tpu_custom_call.1} parent=0
    _
  %s6 = ssub.s32 1, %s4
  %s7 = scalar_select 0, %s6, %s4
  $region1: #{tpu_custom_call.1} parent=0
    #allocation3 [shape = 'u8[4096]{0}', space=vmem, size = 0x1000, scoped, tag = 'input window, operand 0, single buffered']
    #allocation4 [shape = 's32[1]{0}', space=sflag, size = 0x4, scoped, tag = 'scoped memory for tpu_custom_call.1']
    #allocation5 [shape = 's32[1]{0}', space=sflag, size = 0x4, scoped, tag = 'scoped memory for tpu_custom_call.1']
    #allocation6 [shape = 'u8[32768]{0}', space=vmem, size = 0x8000, scoped, tag = 'input window, operand 1, single buffered']
    #allocation7 [shape = 's32[1]{0}', space=sflag, size = 0x4, scoped, tag = 'scoped memory for tpu_custom_call.1']
    #allocation8 [shape = 'u8[8192]{0}', space=vmem, size = 0x2000, scoped, tag = 'output window, operand 0, single buffered']
    %8 = vsyncpa [#allocation4], 0
    %9 = vsyncpa [#allocation7], 0
    %10 = vsyncpa [#allocation5], 0
    // Predicated region
    $region2: #{tpu_custom_call.1} parent=1 // pred_check
      _
    $region3: #{tpu_custom_call.1} parent=1 // pred_check_branch
      %12 = sbr.rel (0) target = $region5
    $region4: #{tpu_custom_call.1} parent=1 // pred_region
      %s14 = ssub.s32 128, 128
      %15 = vsyncadd [#allocation4], %s14
      %s16 = sshll.u32 [#allocation3], 4
      %s17 = int_to_ptr.vmem [resolvable:$true] %s16
      %22 = dma.hbm_to_vmem [thread:$0]  %s0, 128, %s17, [#allocation4], 64, 64, 4
    $region5: #{tpu_custom_call.1} parent=1 // pred_fallthru
      _
    // Predicated region
    $region6: #{tpu_custom_call.1} parent=1 // pred_check
      _
    $region7: #{tpu_custom_call.1} parent=1 // pred_check_branch
      %24 = sbr.rel (0) target = $region9
    $region8: #{tpu_custom_call.1} parent=1 // pred_region
      %s26 = ssub.s32 1024, 1024
      %27 = vsyncadd [#allocation7], %s26
      %s28 = sshll.u32 [#allocation6], 4
      %s29 = int_to_ptr.vmem [resolvable:$true] %s28
      %34 = dma.hbm_to_vmem [thread:$0]  %s1, 1024, %s29, [#allocation7], 64, 64, 4
    $region9: #{tpu_custom_call.1} parent=1 // pred_fallthru
      _
    // Predicated region
    $region10: #{tpu_custom_call.1} parent=1 // pred_check
      _
    $region11: #{tpu_custom_call.1} parent=1 // pred_check_branch
      %36 = sbr.rel (0) target = $region13
    $region12: #{tpu_custom_call.1} parent=1 // pred_region
      _
    $region13: #{tpu_custom_call.1} parent=1 // pred_fallthru
      _
    // Predicated region
    $region14: #{tpu_custom_call.1} parent=1 // pred_check
      _
    $region15: #{tpu_custom_call.1} parent=1 // pred_check_branch
      %38 = sbr.rel (0) target = $region17
    $region16: #{tpu_custom_call.1} parent=1 // pred_region
      %39 = dma.done [#allocation4], 128
    $region17: #{tpu_custom_call.1} parent=1 // pred_fallthru
      _
    // Predicated region
    $region18: #{tpu_custom_call.1} parent=1 // pred_check
      _
    $region19: #{tpu_custom_call.1} parent=1 // pred_check_branch
      %41 = sbr.rel (0) target = $region21
    $region20: #{tpu_custom_call.1} parent=1 // pred_region
      %42 = dma.done [#allocation7], 1024
    $region21: #{tpu_custom_call.1} parent=1 // pred_fallthru
      _
    %p46 = scmp.eq.s32.totalorder 0, 0
    // Predicated region
    $region22: #{tpu_custom_call.1} parent=1 // pred_check
      %p47 = pneg %p46
    $region23: #{tpu_custom_call.1} parent=1 // pred_check_branch
      %49 = sbr.rel (%p47) target = $region25
    $region24: #{tpu_custom_call.1} parent=1 // pred_region
      %50 = vst [vmem:[#allocation2] sm:$0xff] 0.0
      %51 = vst [vmem:[#allocation2 + $0x8] sm:$0xff] 0.0
    $region25: #{tpu_custom_call.1} parent=1 // pred_fallthru
      _
    %v52 = vld [vmem:[#allocation6] sm:$0xf]
    %v53 = vld [vmem:[#allocation6 + $0x4] sm:$0xf]
    %v54 = vld [vmem:[#allocation6 + $0x8] sm:$0xf]
    %v55 = vld [vmem:[#allocation6 + $0xc] sm:$0xf]
    %v56 = vld [vmem:[#allocation6 + $0x10] sm:$0xf]
    %v57 = vld [vmem:[#allocation6 + $0x14] sm:$0xf]
    %v58 = vld [vmem:[#allocation6 + $0x18] sm:$0xf]
    %v59 = vld [vmem:[#allocation6 + $0x1c] sm:$0xf]
    %v60 = vld [vmem:[#allocation6 + $0x20] sm:$0xf]
    %v61 = vld [vmem:[#allocation6 + $0x24] sm:$0xf]
    %v62 = vld [vmem:[#allocation6 + $0x28] sm:$0xf]
    %v63 = vld [vmem:[#allocation6 + $0x2c] sm:$0xf]
    %v64 = vld [vmem:[#allocation6 + $0x30] sm:$0xf]
    %v65 = vld [vmem:[#allocation6 + $0x34] sm:$0xf]
    %v66 = vld [vmem:[#allocation6 + $0x38] sm:$0xf]
    %v67 = vld [vmem:[#allocation6 + $0x3c] sm:$0xf]
    %v68 = vld [vmem:[#allocation3] sm:$0xf]
    %v69 = vld [vmem:[#allocation3 + $0x4] sm:$0xf]
    %v70 = vmax.bf16 %v52, 3212885888
    %v71 = vmax.bf16 %v53, 3212885888
    %v72 = vmax.bf16 %v54, 3212885888
    %v73 = vmax.bf16 %v55, 3212885888
    %v74 = vmax.bf16 %v56, 3212885888
    %v75 = vmax.bf16 %v57, 3212885888
    %v76 = vmax.bf16 %v58, 3212885888
    %v77 = vmax.bf16 %v59, 3212885888
    %v78 = vmax.bf16 %v60, 3212885888
    %v79 = vmax.bf16 %v61, 3212885888
    %v80 = vmax.bf16 %v62, 3212885888
    %v81 = vmax.bf16 %v63, 3212885888
    %v82 = vmax.bf16 %v64, 3212885888
    %v83 = vmax.bf16 %v65, 3212885888
    %v84 = vmax.bf16 %v66, 3212885888
    %v85 = vmax.bf16 %v67, 3212885888
    %v86 = vmin.bf16 %v70, 1065369472
    %v87 = vmin.bf16 %v71, 1065369472
    %v88 = vmin.bf16 %v72, 1065369472
    %v89 = vmin.bf16 %v73, 1065369472
    %v90 = vmin.bf16 %v74, 1065369472
    %v91 = vmin.bf16 %v75, 1065369472
    %v92 = vmin.bf16 %v76, 1065369472
    %v93 = vmin.bf16 %v77, 1065369472
    %v94 = vmin.bf16 %v78, 1065369472
    %v95 = vmin.bf16 %v79, 1065369472
    %v96 = vmin.bf16 %v80, 1065369472
    %v97 = vmin.bf16 %v81, 1065369472
    %v98 = vmin.bf16 %v82, 1065369472
    %v99 = vmin.bf16 %v83, 1065369472
    %v100 = vmin.bf16 %v84, 1065369472
    %v101 = vmin.bf16 %v85, 1065369472
    %v102 = vld [vmem:[#allocation2] sm:$0xff]
    %v103 = vld [vmem:[#allocation2 + $0x8] sm:$0xff]
    %v106 = vunpack.c.l.b16 %v68
    %v107 = vunpack.c.l.b16 %v69
    %v108 = vpack.c.b16 %v107, %v106
    %v126 = vunpack.c.l.b16 %v86
    %v127 = vunpack.c.l.b16 %v87
    %v128 = vunpack.c.l.b16 %v88
    %v129 = vunpack.c.l.b16 %v89
    %v130 = vunpack.c.l.b16 %v90
    %v131 = vunpack.c.l.b16 %v91
    %v132 = vunpack.c.l.b16 %v92
    %v133 = vunpack.c.l.b16 %v93
    %v134 = vunpack.c.l.b16 %v94
    %v135 = vunpack.c.l.b16 %v95
    %v136 = vunpack.c.l.b16 %v96
    %v137 = vunpack.c.l.b16 %v97
    %v138 = vunpack.c.l.b16 %v98
    %v139 = vunpack.c.l.b16 %v99
    %v140 = vunpack.c.l.b16 %v100
    %v141 = vunpack.c.l.b16 %v101
    %v142 = vpack.c.b16 %v127, %v126
    %v143 = vpack.c.b16 %v129, %v128
    %v144 = vpack.c.b16 %v131, %v130
    %v145 = vpack.c.b16 %v133, %v132
    %v146 = vpack.c.b16 %v135, %v134
    %v147 = vpack.c.b16 %v137, %v136
    %v148 = vpack.c.b16 %v139, %v138
    %v149 = vpack.c.b16 %v141, %v140
    %158 = vmatprep.subr.bf16.mxu0 0
    %159 = vmatpush1.bf16.xpose.msra.mxu0 %v149
    %160 = vmatprep.subr.bf16.mxu0 0
    %161 = vmatpush1.bf16.xpose.msra.mxu0 %v148
    %162 = vmatprep.subr.bf16.mxu0 0
    %163 = vmatpush1.bf16.xpose.msra.mxu0 %v147
    %164 = vmatprep.subr.bf16.mxu0 0
    %165 = vmatpush1.bf16.xpose.msra.mxu0 %v146
    %166 = vmatprep.subr.bf16.mxu0 0
    %167 = vmatpush1.bf16.xpose.msra.mxu0 %v145
    %168 = vmatprep.subr.bf16.mxu0 0
    %169 = vmatpush1.bf16.xpose.msra.mxu0 %v144
    %170 = vmatprep.subr.bf16.mxu0 0
    %171 = vmatpush1.bf16.xpose.msra.mxu0 %v143
    %172 = vmatprep.subr.bf16.mxu0 0
    %173 = vmatpush1.bf16.xpose.msra.mxu0 %v142
    %174 = vmatprep.subr.bf16.mxu0 0
    %175 = vmatpush2.bf16.xpose.msra.mxu0 0
    %176 = vmatprep.subr.bf16.mxu0 0
    %177 = vmatpush2.bf16.xpose.msra.mxu0 0
    %178 = vmatprep.subr.bf16.mxu0 0
    %179 = vmatpush2.bf16.xpose.msra.mxu0 0
    %180 = vmatprep.subr.bf16.mxu0 0
    %181 = vmatpush2.bf16.xpose.msra.mxu0 0
    %182 = vmatprep.subr.bf16.mxu0 0
    %183 = vmatpush2.bf16.xpose.msra.mxu0 0
    %184 = vmatprep.subr.bf16.mxu0 0
    %185 = vmatpush2.bf16.xpose.msra.mxu0 0
    %186 = vmatprep.subr.bf16.mxu0 0
    %187 = vmatpush2.bf16.xpose.msra.mxu0 0
    %188 = vmatprep.subr.bf16.mxu0 0
    %189 = vmatpush2.bf16.xpose.msra.mxu0 0
    %190 = vmatprep.mubr.bf16.mxu0 0
    %191 = vmatmul.mubr.bf16.gmra.mxu0 %v108
    %v192 = vpop.f32.mrf.mxu0
    %v193 = vadd.f32 0.0, %v192
    %v194 = vpop.f32.mrf.mxu0
    %v195 = vpop.f32.mrf.mxu0
    %v196 = vadd.f32 0.0, %v195
    %v197 = vpop.f32.mrf.mxu0
    %198 = vdwg.mxu0
    %v199 = vadd.f32 %v102, %v193
    %v200 = vadd.f32 %v103, %v196
    %201 = vst [vmem:[#allocation2] sm:$0xff] %v199
    %202 = vst [vmem:[#allocation2 + $0x8] sm:$0xff] %v200
    // Predicated region
    $region26: #{tpu_custom_call.1} parent=1 // pred_check
      %p203 = pneg %p46
    $region27: #{tpu_custom_call.1} parent=1 // pred_check_branch
      %205 = sbr.rel (%p203) target = $region29
    $region28: #{tpu_custom_call.1} parent=1 // pred_region
      %v206 = vld [vmem:[#allocation2] sm:$0xff]
      %v207 = vld [vmem:[#allocation2 + $0x8] sm:$0xff]
      %v208 = vld [vmem:[%s2] sm:$0x1]
      %v210 = vlaneseq
      %v211 = vshrl.u32 %v210, 7
      %v212 = vsub.s32 0, %v211
      %v213 = vrot.slane %v208, %v212
      %v215 = vadd.f32 %v206, %v213
      %v216 = vadd.f32 %v207, %v213
      %217 = vst [vmem:[#allocation8] sm:$0xff] %v215
      %218 = vst [vmem:[#allocation8 + $0x8] sm:$0xff] %v216
    $region29: #{tpu_custom_call.1} parent=1 // pred_fallthru
      _
    // Predicated region
    $region30: #{tpu_custom_call.1} parent=1 // pred_check
      _
    $region31: #{tpu_custom_call.1} parent=1 // pred_check_branch
      %220 = sbr.rel (0) target = $region33
    $region32: #{tpu_custom_call.1} parent=1 // pred_region
      %s222 = ssub.s32 256, 256
      %223 = vsyncadd [#allocation5], %s222
      %s224 = sshll.u32 [#allocation8], 4
      %s225 = int_to_ptr.vmem [resolvable:$true] %s224
      %230 = dma.vmem_to_hbm [thread:$0]  %s225, 256, %s3, [#allocation5], 128, 128, 8
    $region33: #{tpu_custom_call.1} parent=1 // pred_fallthru
      _
    // Predicated region
    $region34: #{tpu_custom_call.1} parent=1 // pred_check
      _
    $region35: #{tpu_custom_call.1} parent=1 // pred_check_branch
      %232 = sbr.rel (0) target = $region37
    $region36: #{tpu_custom_call.1} parent=1 // pred_region
      %233 = dma.done [#allocation5], 256
    $region37: #{tpu_custom_call.1} parent=1 // pred_fallthru
      _
    %234 = vsyncpa [#allocation4], 1
    %235 = vsyncpa [#allocation7], 1
    %236 = vsyncpa [#allocation5], 1

</llo_original>
